<compile_context>
chip_gen: v6e
topology: v6e:2x2x1
jax: 0.10.0
libtpu: 0.0.40
codegen_flags: <defaults>
</compile_context>

<pallas_src>
import functools

import jax
import jax.numpy as jnp
from jax.experimental import pallas as pl
from jax.experimental.pallas import tpu as pltpu


# --------------------------------------------------------------------------- #
# Fused Pallas kernel: conv-bias add + InstantLayerNorm2d + PReLU
# --------------------------------------------------------------------------- #
def _bias_iln2d_prelu_kernel(x_ref, cb_ref, g_ref, b_ref, a_ref, o_ref, *,
                             eps, n_feat):
    """One (b_blk, C, tt, F_out) tile of the post-conv pipeline.

    Stats are per (b, t) row over the full (C, F_out) slab, which is entirely
    inside the block, so every grid step is independent ("parallel" x2).
    """
    x = x_ref[...].astype(jnp.float32)                       # (bb, C, tt, Fo)
    x = x + cb_ref[...].astype(jnp.float32)                  # conv bias add

    # Two-pass statistics over (C, F) per (b, t).
    s = jnp.sum(jnp.sum(x, axis=3, keepdims=True), axis=1, keepdims=True)
    mean = s * jnp.float32(1.0 / n_feat)                     # (bb, 1, tt, 1)
    d = x - mean
    ss = jnp.sum(jnp.sum(d * d, axis=3, keepdims=True), axis=1, keepdims=True)
    var = ss * jnp.float32(1.0 / (n_feat - 1))               # unbiased, torch.std
    # Module formula, verbatim: denom = sqrt(torch.std(...) + eps)
    denom = jnp.sqrt(jnp.sqrt(var) + jnp.float32(eps))
    y = d / denom
    y = y * g_ref[...].astype(jnp.float32) + b_ref[...].astype(jnp.float32)

    a = a_ref[...].astype(jnp.float32)                       # PReLU (per channel)
    y = jnp.where(y >= 0, y, y * a)
    o_ref[...] = y.astype(o_ref.dtype)


# --------------------------------------------------------------------------- #
# Tile selection (VMEM-budget driven, per-generation via get_tpu_info)
# --------------------------------------------------------------------------- #
def _vmem_capacity_bytes():
    try:
        return int(pltpu.get_tpu_info().vmem_capacity_bytes)
    except Exception:
        return 64 << 20          # conservative fallback: v7x per-core VMEM


def _pick_tiles(batch, seq, row_bytes):
    """Pick (b_blk, tt): ~4 MiB per input tile, >= 4 grid steps when possible."""
    cap = _vmem_capacity_bytes()
    resident_budget = min(40 << 20, cap // 2)     # ~32 MiB on v7x, 40 MiB v5e/v6e
    tile_target = min(4 << 20, max(row_bytes, resident_budget // 7))
    rows = max(1, tile_target // row_bytes)       # rows of (C*F_out) per tile

    # T tile: multiple of 8 (sublane) or the full T extent.
    tt = seq if rows >= seq else max(8, (int(rows) // 8) * 8)
    tt = min(tt, seq)
    b_blk = max(1, min(batch, int(rows) // max(tt, 1)))

    def steps(bb, t_):
        return (-(-batch // bb)) * (-(-seq // t_))

    # Keep at least ~4 grid steps so both TensorCores (v7x) get work.
    while steps(b_blk, tt) < 4:
        if b_blk > 1:
            b_blk = max(1, b_blk // 2)
        elif tt > 8:
            tt = min(seq, max(8, ((tt // 2) // 8) * 8))
        else:
            break
    return b_blk, tt, resident_budget, cap


# --------------------------------------------------------------------------- #
# pallas_call wrapper for the fused post-conv stage
# --------------------------------------------------------------------------- #
def _fused_bias_norm_prelu(conv_out, conv_bias, gain, bias, alpha, eps,
                           tile=None):
    b, c, t, f = conv_out.shape
    n_feat = c * f
    assert n_feat >= 2, "unbiased std needs at least 2 reduced elements"
    itemsize = jnp.dtype(conv_out.dtype).itemsize
    row_bytes = c * f * itemsize

    if tile is None:
        b_blk, tt, resident_budget, cap = _pick_tiles(b, t, row_bytes)
    else:                                          # test hook / manual override
        b_blk, tt = tile
        cap = _vmem_capacity_bytes()
        resident_budget = min(40 << 20, cap // 2)

    n_b = pl.cdiv(b, b_blk)
    n_t = pl.cdiv(t, tt)

    cb4 = conv_bias.reshape(1, c, 1, 1)
    a4 = alpha.reshape(1, c, 1, 1)
    g4 = gain.reshape(1, c, 1, 1)
    bb4 = bias.reshape(1, c, 1, 1)

    kernel = functools.partial(_bias_iln2d_prelu_kernel, eps=eps, n_feat=n_feat)
    cost = pl.CostEstimate(
        flops=10 * b * c * t * f,
        transcendentals=2 * b * t,
        bytes_accessed=2 * b * c * t * f * itemsize,
    )
    vmem_limit = int(min(cap * 3 // 4, resident_budget + (8 << 20)))

    x_spec = pl.BlockSpec((b_blk, c, tt, f), lambda i, j: (i, 0, j, 0))
    param_spec = pl.BlockSpec((1, c, 1, 1), lambda i, j: (0, 0, 0, 0))

    return pl.pallas_call(
        kernel,
        out_shape=jax.ShapeDtypeStruct((b, c, t, f), conv_out.dtype),
        grid_spec=pltpu.PrefetchScalarGridSpec(
            num_scalar_prefetch=0,
            grid=(n_b, n_t),                                   # both independent
            in_specs=[x_spec, param_spec, param_spec, param_spec, param_spec],
            out_specs=x_spec,
        ),
        compiler_params=pltpu.CompilerParams(
            dimension_semantics=("parallel", "parallel"),
            vmem_limit_bytes=vmem_limit,
        ),
        cost_estimate=cost,
    )(conv_out, cb4, g4, bb4, a4)


# --------------------------------------------------------------------------- #
# Full Conv2dunit forward
# --------------------------------------------------------------------------- #
def conv2dunit_forward(x, conv_w, conv_b, gain, bias, alpha, *, eps=1e-5,
                       tile=None):
    """Conv2dunit forward.  x: (B, C, T, F); conv_w: (C, C, k_t, k_f);
    conv_b/alpha: (C,); gain/bias: (1, C, 1, 1).  Returns (B, C, T, F_out)."""
    k_t = conv_w.shape[2]
    # ConstantPad2d((0, 0, k_t-1, 0)) folded into the conv's explicit padding —
    # no jnp.pad / extra HBM pass.
    conv_out = jax.lax.conv_general_dilated(
        x, conv_w, window_strides=(1, 2),
        padding=((k_t - 1, 0), (0, 0)),
        dimension_numbers=("NCHW", "OIHW", "NCHW"),
    )
    # TODO(synk): the Conv2d itself is left on XLA's MXU conv; only the
    # post-conv bias-add + InstantLayerNorm2d + PReLU are the Pallas kernel.
    return _fused_bias_norm_prelu(conv_out, conv_b, gain, bias, alpha, eps,
                                  tile=tile)


# --------------------------------------------------------------------------- #
# Pure-JAX reference (matches the PyTorch module exactly)
# --------------------------------------------------------------------------- #
def conv2dunit_ref(x, conv_w, conv_b, gain, bias, alpha, eps=1e-5):
    k_t = conv_w.shape[2]
    xp = jnp.pad(x, ((0, 0), (0, 0), (k_t - 1, 0), (0, 0))) if k_t > 1 else x
    y = jax.lax.conv_general_dilated(
        xp, conv_w, window_strides=(1, 2), padding="VALID",
        dimension_numbers=("NCHW", "OIHW", "NCHW"))
    y = y + conv_b.reshape(1, -1, 1, 1)
    mean = jnp.mean(y, axis=(1, 3), keepdims=True)
    var = jnp.var(y, axis=(1, 3), keepdims=True, ddof=1)     # torch.std unbiased
    y = (y - mean) / jnp.sqrt(jnp.sqrt(var) + eps)           # sqrt(std + eps)
    y = y * gain + bias
    a = alpha.reshape(1, -1, 1, 1)
    return jnp.where(y >= 0, y, a * y)


if __name__ == "__main__":
    key = jax.random.PRNGKey(0)
    ks = jax.random.split(key, 12)

    # ---- case 1: module-consistent small shapes, k_t > 1 (causal pad path),
    #      automatic tile selection ----
    B, C, T, F = 2, 4, 16, 16
    k = (2, 3)
    x = jax.random.normal(ks[0], (B, C, T, F), jnp.float32)
    w = jax.random.normal(ks[1], (C, C, k[0], k[1]), jnp.float32) * 0.2
    cb = jax.random.normal(ks[2], (C,), jnp.float32) * 0.1
    gain = 1.0 + 0.1 * jax.random.normal(ks[3], (1, C, 1, 1), jnp.float32)
    bias = 0.1 * jax.random.normal(ks[4], (1, C, 1, 1), jnp.float32)
    alpha = 0.25 + 0.05 * jax.random.normal(ks[5], (C,), jnp.float32)

    out = jax.block_until_ready(conv2dunit_forward(x, w, cb, gain, bias, alpha))
    ref = conv2dunit_ref(x, w, cb, gain, bias, alpha)
    F_out = (F - k[1]) // 2 + 1
    assert out.shape == ref.shape == (B, C, T, F_out)
    err1 = jnp.max(jnp.abs(out - ref))
    assert jnp.allclose(out, ref, atol=1e-4, rtol=1e-4), f"case1 max err={err1}"

    # ---- case 2: ragged B and T blocks, b_blk > 1, k_t == 1 (no causal pad),
    #      forced small tiles so the grid is genuinely multi-step ----
    B2, C2, T2, F2 = 3, 6, 50, 32
    k2 = (1, 3)
    x2 = jax.random.normal(ks[6], (B2, C2, T2, F2), jnp.float32)
    w2 = jax.random.normal(ks[7], (C2, C2, k2[0], k2[1]), jnp.float32) * 0.2
    cb2 = jax.random.normal(ks[8], (C2,), jnp.float32) * 0.1
    gain2 = 1.0 + 0.1 * jax.random.normal(ks[9], (1, C2, 1, 1), jnp.float32)
    bias2 = 0.1 * jax.random.normal(ks[10], (1, C2, 1, 1), jnp.float32)
    alpha2 = 0.25 + 0.05 * jax.random.normal(ks[11], (C2,), jnp.float32)

    out2 = jax.block_until_ready(
        conv2dunit_forward(x2, w2, cb2, gain2, bias2, alpha2, tile=(2, 16)))
    ref2 = conv2dunit_ref(x2, w2, cb2, gain2, bias2, alpha2)
    err2 = jnp.max(jnp.abs(out2 - ref2))
    assert out2.shape == ref2.shape
    assert jnp.allclose(out2, ref2, atol=1e-4, rtol=1e-4), f"case2 max err={err2}"

    print("KERNEL_OK")
</pallas_src>

<mosaic_0001>
module attributes {stable_mosaic.version = 11 : i64} {
  func.func @_bias_iln2d_prelu_kernel(%arg0: i32, %arg1: i32, %arg2: memref<1x4x8x7xf32, #tpu.memory_space<vmem>>, %arg3: memref<1x4x1x1xf32, #tpu.memory_space<vmem>>, %arg4: memref<1x4x1x1xf32, #tpu.memory_space<vmem>>, %arg5: memref<1x4x1x1xf32, #tpu.memory_space<vmem>>, %arg6: memref<1x4x1x1xf32, #tpu.memory_space<vmem>>, %arg7: memref<1x4x8x7xf32, #tpu.memory_space<vmem>>) attributes {dimension_semantics = [#tpu.dimension_semantics<parallel>, #tpu.dimension_semantics<parallel>], iteration_bounds = array<i64: 2, 2>, scalar_prefetch = 0 : i64, scratch_operands = 0 : i64, tpu.core_type = #tpu.core_type<tc>, window_params = [{transform_indices = @transform_0, window_bounds = array<i64: 1, 4, 8, 7>}, {pipeline_mode = #tpu.pipeline_mode<synchronous>, transform_indices = @transform_1, window_bounds = array<i64: 1, 4, 1, 1>}, {pipeline_mode = #tpu.pipeline_mode<synchronous>, transform_indices = @transform_2, window_bounds = array<i64: 1, 4, 1, 1>}, {pipeline_mode = #tpu.pipeline_mode<synchronous>, transform_indices = @transform_3, window_bounds = array<i64: 1, 4, 1, 1>}, {pipeline_mode = #tpu.pipeline_mode<synchronous>, transform_indices = @transform_4, window_bounds = array<i64: 1, 4, 1, 1>}, {transform_indices = @transform_5, window_bounds = array<i64: 1, 4, 8, 7>}]} {
    %c0 = arith.constant 0 : index
    %c0_0 = arith.constant 0 : index
    %c0_1 = arith.constant 0 : index
    %c0_2 = arith.constant 0 : index
    %0 = vector.load %arg2[%c0, %c0_0, %c0_1, %c0_2] : memref<1x4x8x7xf32, #tpu.memory_space<vmem>>, vector<1x4x8x7xf32>
    %c0_3 = arith.constant 0 : index
    %c0_4 = arith.constant 0 : index
    %c0_5 = arith.constant 0 : index
    %c0_6 = arith.constant 0 : index
    %1 = vector.load %arg3[%c0_3, %c0_4, %c0_5, %c0_6] : memref<1x4x1x1xf32, #tpu.memory_space<vmem>>, vector<1x4x1x1xf32>
    %2 = vector.broadcast %1 : vector<1x4x1x1xf32> to vector<1x4x8x7xf32>
    %3 = arith.addf %0, %2 : vector<1x4x8x7xf32>
    %cst = arith.constant dense<0.000000e+00> : vector<1x4x8xf32>
    %4 = vector.multi_reduction <add>, %3, %cst [3] : vector<1x4x8x7xf32> to vector<1x4x8xf32>
    %5 = vector.shape_cast %4 : vector<1x4x8xf32> to vector<1x4x8x1xf32>
    %cst_7 = arith.constant dense<0.000000e+00> : vector<1x8x1xf32>
    %6 = vector.multi_reduction <add>, %5, %cst_7 [1] : vector<1x4x8x1xf32> to vector<1x8x1xf32>
    %7 = vector.shape_cast %6 : vector<1x8x1xf32> to vector<1x1x8x1xf32>
    %cst_8 = arith.constant 0.0357142873 : f32
    %8 = vector.broadcast %cst_8 : f32 to vector<1x1x8x1xf32>
    %9 = arith.mulf %7, %8 : vector<1x1x8x1xf32>
    %10 = vector.broadcast %9 : vector<1x1x8x1xf32> to vector<1x4x8x7xf32>
    %11 = arith.subf %3, %10 : vector<1x4x8x7xf32>
    %12 = arith.mulf %11, %11 : vector<1x4x8x7xf32>
    %cst_9 = arith.constant dense<0.000000e+00> : vector<1x4x8xf32>
    %13 = vector.multi_reduction <add>, %12, %cst_9 [3] : vector<1x4x8x7xf32> to vector<1x4x8xf32>
    %14 = vector.shape_cast %13 : vector<1x4x8xf32> to vector<1x4x8x1xf32>
    %cst_10 = arith.constant dense<0.000000e+00> : vector<1x8x1xf32>
    %15 = vector.multi_reduction <add>, %14, %cst_10 [1] : vector<1x4x8x1xf32> to vector<1x8x1xf32>
    %16 = vector.shape_cast %15 : vector<1x8x1xf32> to vector<1x1x8x1xf32>
    %cst_11 = arith.constant 0.0370370373 : f32
    %17 = vector.broadcast %cst_11 : f32 to vector<1x1x8x1xf32>
    %18 = arith.mulf %16, %17 : vector<1x1x8x1xf32>
    %19 = math.sqrt %18 : vector<1x1x8x1xf32>
    %cst_12 = arith.constant 9.99999974E-6 : f32
    %20 = vector.broadcast %cst_12 : f32 to vector<1x1x8x1xf32>
    %21 = arith.addf %19, %20 : vector<1x1x8x1xf32>
    %22 = math.sqrt %21 : vector<1x1x8x1xf32>
    %23 = vector.broadcast %22 : vector<1x1x8x1xf32> to vector<1x4x8x7xf32>
    %24 = arith.divf %11, %23 : vector<1x4x8x7xf32>
    %c0_13 = arith.constant 0 : index
    %c0_14 = arith.constant 0 : index
    %c0_15 = arith.constant 0 : index
    %c0_16 = arith.constant 0 : index
    %25 = vector.load %arg4[%c0_13, %c0_14, %c0_15, %c0_16] : memref<1x4x1x1xf32, #tpu.memory_space<vmem>>, vector<1x4x1x1xf32>
    %26 = vector.broadcast %25 : vector<1x4x1x1xf32> to vector<1x4x8x7xf32>
    %27 = arith.mulf %24, %26 : vector<1x4x8x7xf32>
    %c0_17 = arith.constant 0 : index
    %c0_18 = arith.constant 0 : index
    %c0_19 = arith.constant 0 : index
    %c0_20 = arith.constant 0 : index
    %28 = vector.load %arg5[%c0_17, %c0_18, %c0_19, %c0_20] : memref<1x4x1x1xf32, #tpu.memory_space<vmem>>, vector<1x4x1x1xf32>
    %29 = vector.broadcast %28 : vector<1x4x1x1xf32> to vector<1x4x8x7xf32>
    %30 = arith.addf %27, %29 : vector<1x4x8x7xf32>
    %c0_21 = arith.constant 0 : index
    %c0_22 = arith.constant 0 : index
    %c0_23 = arith.constant 0 : index
    %c0_24 = arith.constant 0 : index
    %31 = vector.load %arg6[%c0_21, %c0_22, %c0_23, %c0_24] : memref<1x4x1x1xf32, #tpu.memory_space<vmem>>, vector<1x4x1x1xf32>
    %cst_25 = arith.constant 0.000000e+00 : f32
    %32 = vector.broadcast %cst_25 : f32 to vector<1x4x8x7xf32>
    %33 = arith.cmpf oge, %30, %32 : vector<1x4x8x7xf32>
    %34 = vector.broadcast %31 : vector<1x4x1x1xf32> to vector<1x4x8x7xf32>
    %35 = arith.mulf %30, %34 : vector<1x4x8x7xf32>
    %36 = arith.select %33, %30, %35 : vector<1x4x8x7xi1>, vector<1x4x8x7xf32>
    %c0_26 = arith.constant 0 : index
    %c0_27 = arith.constant 0 : index
    %c0_28 = arith.constant 0 : index
    %c0_29 = arith.constant 0 : index
    %37 = vector.load %arg7[%c0_26, %c0_27, %c0_28, %c0_29] : memref<1x4x8x7xf32, #tpu.memory_space<vmem>>, vector<1x4x8x7xf32>
    tpu.vector_store %arg7[%c0_26, %c0_27, %c0_28, %c0_29], %36 {strides = array<i32>} : memref<1x4x8x7xf32, #tpu.memory_space<vmem>>, vector<1x4x8x7xf32>,
    return
  }
  func.func @transform_0(%arg0: i32, %arg1: i32) -> (i32, i32, i32, i32) {
    %c0_i32 = arith.constant 0 : i32
    %c0_i32_0 = arith.constant 0 : i32
    %c0_i32_1 = arith.constant 0 : i32
    return %arg0, %c0_i32, %arg1, %c0_i32_0 : i32, i32, i32, i32
  }
  func.func @transform_1(%arg0: i32, %arg1: i32) -> (i32, i32, i32, i32) {
    %c0_i32 = arith.constant 0 : i32
    %c0_i32_0 = arith.constant 0 : i32
    %c0_i32_1 = arith.constant 0 : i32
    %c0_i32_2 = arith.constant 0 : i32
    %c0_i32_3 = arith.constant 0 : i32
    return %c0_i32, %c0_i32_0, %c0_i32_1, %c0_i32_2 : i32, i32, i32, i32
  }
  func.func @transform_2(%arg0: i32, %arg1: i32) -> (i32, i32, i32, i32) {
    %c0_i32 = arith.constant 0 : i32
    %c0_i32_0 = arith.constant 0 : i32
    %c0_i32_1 = arith.constant 0 : i32
    %c0_i32_2 = arith.constant 0 : i32
    %c0_i32_3 = arith.constant 0 : i32
    return %c0_i32, %c0_i32_0, %c0_i32_1, %c0_i32_2 : i32, i32, i32, i32
  }
  func.func @transform_3(%arg0: i32, %arg1: i32) -> (i32, i32, i32, i32) {
    %c0_i32 = arith.constant 0 : i32
    %c0_i32_0 = arith.constant 0 : i32
    %c0_i32_1 = arith.constant 0 : i32
    %c0_i32_2 = arith.constant 0 : i32
    %c0_i32_3 = arith.constant 0 : i32
    return %c0_i32, %c0_i32_0, %c0_i32_1, %c0_i32_2 : i32, i32, i32, i32
  }
  func.func @transform_4(%arg0: i32, %arg1: i32) -> (i32, i32, i32, i32) {
    %c0_i32 = arith.constant 0 : i32
    %c0_i32_0 = arith.constant 0 : i32
    %c0_i32_1 = arith.constant 0 : i32
    %c0_i32_2 = arith.constant 0 : i32
    %c0_i32_3 = arith.constant 0 : i32
    return %c0_i32, %c0_i32_0, %c0_i32_1, %c0_i32_2 : i32, i32, i32, i32
  }
  func.func @transform_5(%arg0: i32, %arg1: i32) -> (i32, i32, i32, i32) {
    %c0_i32 = arith.constant 0 : i32
    %c0_i32_0 = arith.constant 0 : i32
    %c0_i32_1 = arith.constant 0 : i32
    return %arg0, %c0_i32, %arg1, %c0_i32_0 : i32, i32, i32, i32
  }
}

</mosaic_0001>

<llo_original>
// kernel: tpu_custom_call.1
$region0: #{tpu_custom_call.1}
  #allocation0 [shape = 'u32[]', space=smem, size = 0x4, offset = 0x4, fixed_abs, tag = 'smem constant byte address 0x4 - core index']
  #allocation1 [shape = 'u32[144,128]{1,0:T(1,128)}', space=vmem, size = 0x12000, scoped, tag = 'internal scratch']
  %s0 = inlined_call_operand.vmem [shape: f32[2,4,16,7], index: 0, kind: input, shape index: {}]
  %s1 = inlined_call_operand.vmem [shape: f32[1,4,1,1], index: 1, kind: input, shape index: {}]
  %s2 = inlined_call_operand.vmem [shape: f32[1,4,1,1], index: 2, kind: input, shape index: {}]
  %s3 = inlined_call_operand.vmem [shape: f32[1,4,1,1], index: 3, kind: input, shape index: {}]
  %s4 = inlined_call_operand.vmem [shape: f32[1,4,1,1], index: 4, kind: input, shape index: {}]
  %s5 = inlined_call_operand.vmem [shape: f32[2,4,16,7], index: 5, kind: output, shape index: {}]
  %s6 = sld [smem:[#allocation0]]
  $region125: #{tpu_custom_call.1} parent=0
    _
  %s8 = ssub.s32 1, %s6
  %s9 = scalar_select 0, %s8, %s6
  $region1: #{tpu_custom_call.1} parent=0
    #allocation2 [shape = 'u8[32768]{0}', space=vmem, size = 0x8000, scoped, tag = 'input window, operand 0']
    #allocation3 [shape = 'u8[32768]{0}', space=vmem, size = 0x8000, scoped, tag = 'output window, operand 0']
    loop: start=0, step=1, limit=6
    $region2: #{tpu_custom_call.1} parent=1 // loop_pre_header
      _
    $region3: #{tpu_custom_call.1} parent=1 // loop_header
      %s11 = sphi 0, %s15
      %p12 = scmp.ge.s32.totalorder %s11, 6
      %s18 = sphi 0, %s30
      %s19 = sphi 0, %s26
      %s20 = sphi 0, %s18
      %s21 = sphi 0, %s19
      %s22 = sphi 0, %s20
      %s23 = sphi 0, %s21
      %s35 = sphi 0, %s37
      %s38 = sphi 0, %s35
      %s39 = sphi 0, %s38
      %s55 = sphi 0, %s39
      %s59 = sphi 0, %s59
      %s61 = sphi 0, %s59
      %s62 = sphi 0, %s61
      %s76 = sphi 0, %s62
      %s80 = sphi 0, %s80
      %s82 = sphi 0, %s80
      %s83 = sphi 0, %s82
      %s97 = sphi 0, %s83
      %s101 = sphi 0, %s101
      %s103 = sphi 0, %s101
      %s104 = sphi 0, %s103
      %s118 = sphi 0, %s104
      %s122 = sphi 0, %s122
      %s124 = sphi 0, %s122
      %s125 = sphi 0, %s124
      %s139 = sphi 0, %s125
      %s147 = sphi 0, %s149
      %s150 = sphi 0, %s147
      %s151 = sphi 0, %s150
      %s167 = sphi 0, %s151
    $region4: #{tpu_custom_call.1} parent=1 // loop_header_branch
      %14 = sbr.rel (%p12) target = $region8
    $region5: #{tpu_custom_call.1} parent=1 // loop_body
      %s16 = ssub.s32 %s11, 1
      %s17 = ssub.s32 %s11, 2
      %s24 = sadd.s32 1, %s19
      %p25 = scmp.ge.s32.totalorder %s24, 2
      %s26 = scalar_select %p25, 0, %s24
      %s27 = sadd.s32 1, %s18
      %s28 = scalar_select %p25, %s27, %s18
      %p29 = scmp.ge.s32.totalorder %s28, 2
      %s30 = scalar_select %p29, 0, %s28
      %s31 = ssub.s32 %s18, %s30
      %s32 = ssub.s32 %s19, %s26
      %s33 = sor.u32 %s31, %s32
      %p34 = scmp.eq.s32.totalorder %s33, 0
      %s36 = sadd.s32 %s35, 1
      %s37 = scalar_select %p34, %s35, %s36
      %p40 = pneg %p34
      %p41 = scmp.eq.s32.totalorder %s11, 3
      %p42 = por %p40, %p41
      %p43 = scmp.ne.s32.totalorder %s35, %s38
      %p44 = scmp.eq.s32.totalorder %s11, 0
      %p45 = por %p43, %p44
      %p46 = scmp.ne.s32.totalorder %s35, %s38
      %p47 = scmp.eq.s32.totalorder %s16, 3
      %p48 = por %p46, %p47
      %p49 = scmp.ne.s32.totalorder %s38, %s39
      %p50 = scmp.eq.s32.totalorder %s16, 0
      %p51 = por %p49, %p50
      %p52 = scmp.ne.s32.totalorder %s38, %s39
      %p53 = scmp.eq.s32.totalorder %s17, 3
      %p54 = por %p52, %p53
      %p56 = scmp.ne.s32.totalorder %s39, %s55
      %p57 = scmp.eq.s32.totalorder %s17, 0
      %p58 = por %p56, %p57
      %s60 = sadd.s32 %s59, 1
      %p63 = scmp.eq.s32.totalorder %s11, 3
      %p64 = scmp.ne.s32.totalorder %s59, %s61
      %p65 = scmp.eq.s32.totalorder %s11, 0
      %p66 = por %p64, %p65
      %p67 = scmp.ne.s32.totalorder %s59, %s61
      %p68 = scmp.eq.s32.totalorder %s16, 3
      %p69 = por %p67, %p68
      %p70 = scmp.ne.s32.totalorder %s61, %s62
      %p71 = scmp.eq.s32.totalorder %s16, 0
      %p72 = por %p70, %p71
      %p73 = scmp.ne.s32.totalorder %s61, %s62
      %p74 = scmp.eq.s32.totalorder %s17, 3
      %p75 = por %p73, %p74
      %p77 = scmp.ne.s32.totalorder %s62, %s76
      %p78 = scmp.eq.s32.totalorder %s17, 0
      %p79 = por %p77, %p78
      %s81 = sadd.s32 %s80, 1
      %p84 = scmp.eq.s32.totalorder %s11, 3
      %p85 = scmp.ne.s32.totalorder %s80, %s82
      %p86 = scmp.eq.s32.totalorder %s11, 0
      %p87 = por %p85, %p86
      %p88 = scmp.ne.s32.totalorder %s80, %s82
      %p89 = scmp.eq.s32.totalorder %s16, 3
      %p90 = por %p88, %p89
      %p91 = scmp.ne.s32.totalorder %s82, %s83
      %p92 = scmp.eq.s32.totalorder %s16, 0
      %p93 = por %p91, %p92
      %p94 = scmp.ne.s32.totalorder %s82, %s83
      %p95 = scmp.eq.s32.totalorder %s17, 3
      %p96 = por %p94, %p95
      %p98 = scmp.ne.s32.totalorder %s83, %s97
      %p99 = scmp.eq.s32.totalorder %s17, 0
      %p100 = por %p98, %p99
      %s102 = sadd.s32 %s101, 1
      %p105 = scmp.eq.s32.totalorder %s11, 3
      %p106 = scmp.ne.s32.totalorder %s101, %s103
      %p107 = scmp.eq.s32.totalorder %s11, 0
      %p108 = por %p106, %p107
      %p109 = scmp.ne.s32.totalorder %s101, %s103
      %p110 = scmp.eq.s32.totalorder %s16, 3
      %p111 = por %p109, %p110
      %p112 = scmp.ne.s32.totalorder %s103, %s104
      %p113 = scmp.eq.s32.totalorder %s16, 0
      %p114 = por %p112, %p113
      %p115 = scmp.ne.s32.totalorder %s103, %s104
      %p116 = scmp.eq.s32.totalorder %s17, 3
      %p117 = por %p115, %p116
      %p119 = scmp.ne.s32.totalorder %s104, %s118
      %p120 = scmp.eq.s32.totalorder %s17, 0
      %p121 = por %p119, %p120
      %s123 = sadd.s32 %s122, 1
      %p126 = scmp.eq.s32.totalorder %s11, 3
      %p127 = scmp.ne.s32.totalorder %s122, %s124
      %p128 = scmp.eq.s32.totalorder %s11, 0
      %p129 = por %p127, %p128
      %p130 = scmp.ne.s32.totalorder %s122, %s124
      %p131 = scmp.eq.s32.totalorder %s16, 3
      %p132 = por %p130, %p131
      %p133 = scmp.ne.s32.totalorder %s124, %s125
      %p134 = scmp.eq.s32.totalorder %s16, 0
      %p135 = por %p133, %p134
      %p136 = scmp.ne.s32.totalorder %s124, %s125
      %p137 = scmp.eq.s32.totalorder %s17, 3
      %p138 = por %p136, %p137
      %p140 = scmp.ne.s32.totalorder %s125, %s139
      %p141 = scmp.eq.s32.totalorder %s17, 0
      %p142 = por %p140, %p141
      %s143 = ssub.s32 %s18, %s30
      %s144 = ssub.s32 %s19, %s26
      %s145 = sor.u32 %s143, %s144
      %p146 = scmp.eq.s32.totalorder %s145, 0
      %s148 = sadd.s32 %s147, 1
      %s149 = scalar_select %p146, %s147, %s148
      %p152 = pneg %p146
      %p153 = scmp.eq.s32.totalorder %s11, 3
      %p154 = por %p152, %p153
      %p155 = scmp.ne.s32.totalorder %s147, %s150
      %p156 = scmp.eq.s32.totalorder %s11, 0
      %p157 = por %p155, %p156
      %p158 = scmp.ne.s32.totalorder %s147, %s150
      %p159 = scmp.eq.s32.totalorder %s16, 3
      %p160 = por %p158, %p159
      %p161 = scmp.ne.s32.totalorder %s150, %s151
      %p162 = scmp.eq.s32.totalorder %s16, 0
      %p163 = por %p161, %p162
      %p164 = scmp.ne.s32.totalorder %s150, %s151
      %p165 = scmp.eq.s32.totalorder %s17, 3
      %p166 = por %p164, %p165
      %p168 = scmp.ne.s32.totalorder %s151, %s167
      %p169 = scmp.eq.s32.totalorder %s17, 0
      %p170 = por %p168, %p169
      %p171 = scmp.le.s32.totalorder 1, %s11
      %p172 = scmp.lt.s32.totalorder %s11, 5
      %p173 = pnand %p171, %p172
      %p174 = pneg %p173
      // Predicated region
      $region9: #{tpu_custom_call.1} parent=5 // pred_check
        _
      $region10: #{tpu_custom_call.1} parent=5 // pred_check_branch
        %176 = sbr.rel (%p173) target = $region12
      $region11: #{tpu_custom_call.1} parent=5 // pred_region
        %s177 = ssub.s32 %s11, 1
        // Predicated region
        $region13: #{tpu_custom_call.1} parent=11 // pred_check
          %p178 = pneg %p72
        $region14: #{tpu_custom_call.1} parent=11 // pred_check_branch
          %180 = sbr.rel (%p178) target = $region16
        $region15: #{tpu_custom_call.1} parent=11 // pred_region
          _
        $region16: #{tpu_custom_call.1} parent=11 // pred_fallthru
          _
        // Predicated region
        $region17: #{tpu_custom_call.1} parent=11 // pred_check
          %p181 = pneg %p93
        $region18: #{tpu_custom_call.1} parent=11 // pred_check_branch
          %183 = sbr.rel (%p181) target = $region20
        $region19: #{tpu_custom_call.1} parent=11 // pred_region
          _
        $region20: #{tpu_custom_call.1} parent=11 // pred_fallthru
          _
        // Predicated region
        $region21: #{tpu_custom_call.1} parent=11 // pred_check
          %p184 = pneg %p114
        $region22: #{tpu_custom_call.1} parent=11 // pred_check_branch
          %186 = sbr.rel (%p184) target = $region24
        $region23: #{tpu_custom_call.1} parent=11 // pred_region
          _
        $region24: #{tpu_custom_call.1} parent=11 // pred_fallthru
          _
        // Predicated region
        $region25: #{tpu_custom_call.1} parent=11 // pred_check
          %p187 = pneg %p135
        $region26: #{tpu_custom_call.1} parent=11 // pred_check_branch
          %189 = sbr.rel (%p187) target = $region28
        $region27: #{tpu_custom_call.1} parent=11 // pred_region
          _
        $region28: #{tpu_custom_call.1} parent=11 // pred_fallthru
          _
      $region12: #{tpu_custom_call.1} parent=5 // pred_fallthru
        _
      %p190 = scmp.lt.s32.totalorder %s11, 4
      // Predicated region
      $region29: #{tpu_custom_call.1} parent=5 // pred_check
        %p191 = pneg %p190
      $region30: #{tpu_custom_call.1} parent=5 // pred_check_branch
        %193 = sbr.rel (%p191) target = $region32
      $region31: #{tpu_custom_call.1} parent=5 // pred_region
        // Predicated region
        $region33: #{tpu_custom_call.1} parent=31 // pred_check
          %p194 = pneg %p45
        $region34: #{tpu_custom_call.1} parent=31 // pred_check_branch
          %196 = sbr.rel (%p194) target = $region36
        $region35: #{tpu_custom_call.1} parent=31 // pred_region
          %s197 = sand.u32 %s35, 1
          %s198 = sand.u32 %s35, 1
          %s199 = smul.addr %s198, 32
          %s200 = scalar_lea.vmem [#allocation2], %s199
          %s201 = smul.addr %s18, 8
          %s202 = sadd.s32 %s19, %s201
          %s203 = smul.addr %s202, 8
          %s204 = scalar_lea.vmem %s0, %s203
          // Predicated region
          $region37: #{tpu_custom_call.1} parent=35 // pred_check
            _
          $region38: #{tpu_custom_call.1} parent=35 // pred_check_branch
            %206 = sbr.rel (0) target = $region40
          $region39: #{tpu_custom_call.1} parent=35 // pred_region
            // Predicated region
            $region41: #{tpu_custom_call.1} parent=39 // pred_check
              _
            $region42: #{tpu_custom_call.1} parent=39 // pred_check_branch
              %208 = sbr.rel (0) target = $region44
            $region43: #{tpu_custom_call.1} parent=39 // pred_region
              // Predicated region
              $region56: #{tpu_custom_call.1} parent=43 // pred_check
                _
              $region57: #{tpu_custom_call.1} parent=43 // pred_check_branch
                %230 = sbr.rel (0) target = $region59
              $region58: #{tpu_custom_call.1} parent=43 // pred_region
                loop: start=0, step=1, limit=1
                $region60: #{tpu_custom_call.1} parent=58 // loop_pre_header
                  _
                $region61: #{tpu_custom_call.1} parent=58 // loop_header
                  %s232 = sphi 0, %s236
                  %p233 = scmp.ge.s32.totalorder %s232, 1
                  %s237 = sphi %s204, %s204
                  %s238 = sphi %s200, %s200
                $region62: #{tpu_custom_call.1} parent=58 // loop_header_branch
                  %235 = sbr.rel (%p233) target = $region66
                $region63: #{tpu_custom_call.1} parent=58 // loop_body
                  %v239 = vld [vmem:[%s237] sm:$0xff]
                  %240 = vst [vmem:[%s238] sm:$0xff] %v239
                  %v241 = vld [vmem:[%s237 + $0x10] sm:$0xff]
                  %242 = vst [vmem:[%s238 + $0x8] sm:$0xff] %v241
                  %v243 = vld [vmem:[%s237 + $0x20] sm:$0xff]
                  %244 = vst [vmem:[%s238 + $0x10] sm:$0xff] %v243
                  %v245 = vld [vmem:[%s237 + $0x30] sm:$0xff]
                  %246 = vst [vmem:[%s238 + $0x18] sm:$0xff] %v245
                $region64: #{tpu_custom_call.1} parent=58 // loop_footer
                  %s236 = sadd.s32 1, %s232
                $region65: #{tpu_custom_call.1} parent=58 // loop_footer_branch
                  %231 = sbr.rel target = $region61
                $region66: #{tpu_custom_call.1} parent=58 // loop_exit
                  _
              $region59: #{tpu_custom_call.1} parent=43 // pred_fallthru
                _
              // Predicated region
              $region67: #{tpu_custom_call.1} parent=43 // pred_check
                _
              $region68: #{tpu_custom_call.1} parent=43 // pred_check_branch
                %248 = sbr.rel target = $region70
              $region69: #{tpu_custom_call.1} parent=43 // pred_region
                _
              $region70: #{tpu_custom_call.1} parent=43 // pred_fallthru
                _
            $region44: #{tpu_custom_call.1} parent=39 // pred_fallthru
              _
            // Predicated region
            $region45: #{tpu_custom_call.1} parent=39 // pred_check
              _
            $region46: #{tpu_custom_call.1} parent=39 // pred_check_branch
              %210 = sbr.rel target = $region48
            $region47: #{tpu_custom_call.1} parent=39 // pred_region
              %s212 = ssub.s32 256, 1
              loop: start=0, step=1, limit=1
              $region49: #{tpu_custom_call.1} parent=47 // loop_pre_header
                _
              $region50: #{tpu_custom_call.1} parent=47 // loop_header
                %s214 = sphi 0, %s218
                %p215 = scmp.ge.s32.totalorder %s214, 1
                %s219 = sphi %s204, %s204
                %s220 = sphi %s200, %s200
              $region51: #{tpu_custom_call.1} parent=47 // loop_header_branch
                %217 = sbr.rel (%p215) target = $region55
              $region52: #{tpu_custom_call.1} parent=47 // loop_body
                %v221 = vld [vmem:[%s219] sm:%s212]
                %222 = vst [vmem:[%s220] sm:%s212] %v221
                %v223 = vld [vmem:[%s219 + $0x10] sm:%s212]
                %224 = vst [vmem:[%s220 + $0x8] sm:%s212] %v223
                %v225 = vld [vmem:[%s219 + $0x20] sm:%s212]
                %226 = vst [vmem:[%s220 + $0x10] sm:%s212] %v225
                %v227 = vld [vmem:[%s219 + $0x30] sm:%s212]
                %228 = vst [vmem:[%s220 + $0x18] sm:%s212] %v227
              $region53: #{tpu_custom_call.1} parent=47 // loop_footer
                %s218 = sadd.s32 1, %s214
              $region54: #{tpu_custom_call.1} parent=47 // loop_footer_branch
                %213 = sbr.rel target = $region50
              $region55: #{tpu_custom_call.1} parent=47 // loop_exit
                _
            $region48: #{tpu_custom_call.1} parent=39 // pred_fallthru
              _
          $region40: #{tpu_custom_call.1} parent=35 // pred_fallthru
            _
          %249 = vnop
        $region36: #{tpu_custom_call.1} parent=31 // pred_fallthru
          _
      $region32: #{tpu_custom_call.1} parent=5 // pred_fallthru
        _
      %p250 = scmp.le.s32.totalorder 1, %s11
      %p251 = scmp.lt.s32.totalorder %s11, 5
      %p252 = pnand %p250, %p251
      %p253 = pneg %p252
      // Predicated region
      $region71: #{tpu_custom_call.1} parent=5 // pred_check
        _
      $region72: #{tpu_custom_call.1} parent=5 // pred_check_branch
        %255 = sbr.rel (%p252) target = $region74
      $region73: #{tpu_custom_call.1} parent=5 // pred_region
        %s256 = ssub.s32 %s11, 1
        %s257 = sand.u32 %s38, 1
        %s258 = sand.u32 %s38, 1
        %s259 = smul.addr %s258, 32
        %s260 = scalar_lea.vmem [#allocation2], %s259
        // Predicated region
        $region75: #{tpu_custom_call.1} parent=73 // pred_check
          %p261 = pneg %p51
        $region76: #{tpu_custom_call.1} parent=73 // pred_check_branch
          %263 = sbr.rel (%p261) target = $region78
        $region77: #{tpu_custom_call.1} parent=73 // pred_region
          _
        $region78: #{tpu_custom_call.1} parent=73 // pred_fallthru
          _
        %s264 = sand.u32 %s38, 1
        %s265 = sand.u32 %s38, 1
        %s266 = smul.addr %s265, 32
        %s267 = scalar_lea.vmem [#allocation2], %s266
        %p268 = pneg %p51
        %p269 = pneg %p48
        %p270 = pneg %p72
        %p271 = pneg %p69
        %p272 = pneg %p93
        %p273 = pneg %p90
        %p274 = pneg %p114
        %p275 = pneg %p111
        %p276 = pneg %p135
        %p277 = pneg %p132
        %p278 = pneg %p163
        %p279 = pneg %p160
        %s280 = sand.u32 %s150, 1
        %s281 = sand.u32 %s150, 1
        %s282 = smul.addr %s281, 32
        %s283 = scalar_lea.vmem [#allocation3], %s282
        %v284 = vld [vmem:[%s260] sm:$0xff]
        %v285 = vld [vmem:[%s260 + $0x8] sm:$0xff]
        %v286 = vld [vmem:[%s260 + $0x10] sm:$0xff]
        %v287 = vld [vmem:[%s260 + $0x18] sm:$0xff]
        %v288 = vld [vmem:[%s1] sm:$0x1]
        %v289 = vld [vmem:[%s1 + $0x1] sm:$0x1]
        %v290 = vld [vmem:[%s1 + $0x2] sm:$0x1]
        %v291 = vld [vmem:[%s1 + $0x3] sm:$0x1]
        %v296 = vlaneseq
        %v297 = vshrl.u32 %v296, 7
        %v298 = vsub.s32 0, %v297
        %v299 = vrot.slane %v288, %v298
        %v300 = vlaneseq
        %v301 = vshrl.u32 %v300, 7
        %v302 = vsub.s32 0, %v301
        %v303 = vrot.slane %v289, %v302
        %v304 = vlaneseq
        %v305 = vshrl.u32 %v304, 7
        %v306 = vsub.s32 0, %v305
        %v307 = vrot.slane %v290, %v306
        %v308 = vlaneseq
        %v309 = vshrl.u32 %v308, 7
        %v310 = vsub.s32 0, %v309
        %v311 = vrot.slane %v291, %v310
        %312 = vset.pattern.permute.xlu0 0
        %313 = vperm.xlu0 %312, %v299
        %v314 = vpop.permute.xlu0 %313
        %316 = vset.pattern.permute.xlu0 0
        %317 = vperm.xlu0 %316, %v303
        %v318 = vpop.permute.xlu0 %317
        %320 = vset.pattern.permute.xlu0 0
        %321 = vperm.xlu0 %320, %v307
        %v322 = vpop.permute.xlu0 %321
        %324 = vset.pattern.permute.xlu0 0
        %325 = vperm.xlu0 %324, %v311
        %v326 = vpop.permute.xlu0 %325
        %v328 = vadd.f32 %v284, %v314
        %v329 = vadd.f32 %v285, %v318
        %v330 = vadd.f32 %v286, %v322
        %v331 = vadd.f32 %v287, %v326
        %vm332 = vcmask 56320
        %v333 = vsel %vm332, %v328, 0.0
        %334 = vadd.xlane.f32.xlu0 %v333
        %v335 = vpop.xlane.xlu0 %334
        %v336 = vsel %vm332, %v329, 0.0
        %337 = vadd.xlane.f32.xlu0 %v336
        %v338 = vpop.xlane.xlu0 %337
        %v339 = vsel %vm332, %v330, 0.0
        %340 = vadd.xlane.f32.xlu0 %v339
        %v341 = vpop.xlane.xlu0 %340
        %v342 = vsel %vm332, %v331, 0.0
        %343 = vadd.xlane.f32.xlu0 %v342
        %v344 = vpop.xlane.xlu0 %343
        %v345 = vadd.f32 %v335, %v338
        %v346 = vadd.f32 %v345, %v341
        %v347 = vadd.f32 %v346, %v344
        %v348 = vmul.f32 %v347, 0.035714287
        %v349 = vsub.f32 %v328, %v348
        %v350 = vsub.f32 %v329, %v348
        %v351 = vsub.f32 %v330, %v348
        %v352 = vsub.f32 %v331, %v348
        %v353 = vmul.f32 %v349, %v349
        %v354 = vmul.f32 %v350, %v350
        %v355 = vmul.f32 %v351, %v351
        %v356 = vmul.f32 %v352, %v352
        %v357 = vsel %vm332, %v353, 0.0
        %358 = vadd.xlane.f32.xlu0 %v357
        %v359 = vpop.xlane.xlu0 %358
        %v360 = vsel %vm332, %v354, 0.0
        %361 = vadd.xlane.f32.xlu0 %v360
        %v362 = vpop.xlane.xlu0 %361
        %v363 = vsel %vm332, %v355, 0.0
        %364 = vadd.xlane.f32.xlu0 %v363
        %v365 = vpop.xlane.xlu0 %364
        %v366 = vsel %vm332, %v356, 0.0
        %367 = vadd.xlane.f32.xlu0 %v366
        %v368 = vpop.xlane.xlu0 %367
        %v369 = vadd.f32 %v359, %v362
        %v370 = vadd.f32 %v369, %v365
        %v371 = vadd.f32 %v370, %v368
        %v372 = vmul.f32 %v371, 0.037037037
        %v373 = vrsqrt.pop %v372
        %v374 = vmul.f32 %v372, %v373
        %vm375 = vcmp.eq.f32.partialorder %v372, inf
        %v376 = vsel %vm375, %v372, %v374
        %vm377 = vcmp.eq.f32.partialorder %v372, 0.0
        %v378 = vand.u32 %v372, 2147483648
        %v379 = vsel %vm377, %v378, %v376
        %v380 = vadd.f32 %v379, 1e-05
        %v381 = vrsqrt.pop %v380
        %v382 = vmul.f32 %v380, %v381
        %vm383 = vcmp.eq.f32.partialorder %v380, inf
        %v384 = vsel %vm383, %v380, %v382
        %vm385 = vcmp.eq.f32.partialorder %v380, 0.0
        %v386 = vand.u32 %v380, 2147483648
        %v387 = vsel %vm385, %v386, %v384
        %v388 = vrcp.pop %v387
        %v389 = vmul.f32 %v349, %v388
        %v390 = vmul.f32 %v350, %v388
        %v391 = vmul.f32 %v351, %v388
        %v392 = vmul.f32 %v352, %v388
        %v393 = vld [vmem:[%s2] sm:$0x1]
        %v394 = vld [vmem:[%s2 + $0x1] sm:$0x1]
        %v395 = vld [vmem:[%s2 + $0x2] sm:$0x1]
        %v396 = vld [vmem:[%s2 + $0x3] sm:$0x1]
        %v401 = vlaneseq
        %v402 = vshrl.u32 %v401, 7
        %v403 = vsub.s32 0, %v402
        %v404 = vrot.slane %v393, %v403
        %v405 = vlaneseq
        %v406 = vshrl.u32 %v405, 7
        %v407 = vsub.s32 0, %v406
        %v408 = vrot.slane %v394, %v407
        %v409 = vlaneseq
        %v410 = vshrl.u32 %v409, 7
        %v411 = vsub.s32 0, %v410
        %v412 = vrot.slane %v395, %v411
        %v413 = vlaneseq
        %v414 = vshrl.u32 %v413, 7
        %v415 = vsub.s32 0, %v414
        %v416 = vrot.slane %v396, %v415
        %417 = vset.pattern.permute.xlu0 0
        %418 = vperm.xlu0 %417, %v404
        %v419 = vpop.permute.xlu0 %418
        %421 = vset.pattern.permute.xlu0 0
        %422 = vperm.xlu0 %421, %v408
        %v423 = vpop.permute.xlu0 %422
        %425 = vset.pattern.permute.xlu0 0
        %426 = vperm.xlu0 %425, %v412
        %v427 = vpop.permute.xlu0 %426
        %429 = vset.pattern.permute.xlu0 0
        %430 = vperm.xlu0 %429, %v416
        %v431 = vpop.permute.xlu0 %430
        %v433 = vmul.f32 %v389, %v419
        %v434 = vmul.f32 %v390, %v423
        %v435 = vmul.f32 %v391, %v427
        %v436 = vmul.f32 %v392, %v431
        %v437 = vld [vmem:[%s3] sm:$0x1]
        %v438 = vld [vmem:[%s3 + $0x1] sm:$0x1]
        %v439 = vld [vmem:[%s3 + $0x2] sm:$0x1]
        %v440 = vld [vmem:[%s3 + $0x3] sm:$0x1]
        %v445 = vlaneseq
        %v446 = vshrl.u32 %v445, 7
        %v447 = vsub.s32 0, %v446
        %v448 = vrot.slane %v437, %v447
        %v449 = vlaneseq
        %v450 = vshrl.u32 %v449, 7
        %v451 = vsub.s32 0, %v450
        %v452 = vrot.slane %v438, %v451
        %v453 = vlaneseq
        %v454 = vshrl.u32 %v453, 7
        %v455 = vsub.s32 0, %v454
        %v456 = vrot.slane %v439, %v455
        %v457 = vlaneseq
        %v458 = vshrl.u32 %v457, 7
        %v459 = vsub.s32 0, %v458
        %v460 = vrot.slane %v440, %v459
        %461 = vset.pattern.permute.xlu0 0
        %462 = vperm.xlu0 %461, %v448
        %v463 = vpop.permute.xlu0 %462
        %465 = vset.pattern.permute.xlu0 0
        %466 = vperm.xlu0 %465, %v452
        %v467 = vpop.permute.xlu0 %466
        %469 = vset.pattern.permute.xlu0 0
        %470 = vperm.xlu0 %469, %v456
        %v471 = vpop.permute.xlu0 %470
        %473 = vset.pattern.permute.xlu0 0
        %474 = vperm.xlu0 %473, %v460
        %v475 = vpop.permute.xlu0 %474
        %v477 = vadd.f32 %v433, %v463
        %v478 = vadd.f32 %v434, %v467
        %v479 = vadd.f32 %v435, %v471
        %v480 = vadd.f32 %v436, %v475
        %v481 = vld [vmem:[%s4] sm:$0x1]
        %v482 = vld [vmem:[%s4 + $0x1] sm:$0x1]
        %v483 = vld [vmem:[%s4 + $0x2] sm:$0x1]
        %v484 = vld [vmem:[%s4 + $0x3] sm:$0x1]
        %vm485 = vcmp.ge.f32.partialorder %v477, 0.0
        %vm486 = vcmp.ge.f32.partialorder %v478, 0.0
        %vm487 = vcmp.ge.f32.partialorder %v479, 0.0
        %vm488 = vcmp.ge.f32.partialorder %v480, 0.0
        %v493 = vlaneseq
        %v494 = vshrl.u32 %v493, 7
        %v495 = vsub.s32 0, %v494
        %v496 = vrot.slane %v481, %v495
        %v497 = vlaneseq
        %v498 = vshrl.u32 %v497, 7
        %v499 = vsub.s32 0, %v498
        %v500 = vrot.slane %v482, %v499
        %v501 = vlaneseq
        %v502 = vshrl.u32 %v501, 7
        %v503 = vsub.s32 0, %v502
        %v504 = vrot.slane %v483, %v503
        %v505 = vlaneseq
        %v506 = vshrl.u32 %v505, 7
        %v507 = vsub.s32 0, %v506
        %v508 = vrot.slane %v484, %v507
        %509 = vset.pattern.permute.xlu0 0
        %510 = vperm.xlu0 %509, %v496
        %v511 = vpop.permute.xlu0 %510
        %513 = vset.pattern.permute.xlu0 0
        %514 = vperm.xlu0 %513, %v500
        %v515 = vpop.permute.xlu0 %514
        %517 = vset.pattern.permute.xlu0 0
        %518 = vperm.xlu0 %517, %v504
        %v519 = vpop.permute.xlu0 %518
        %521 = vset.pattern.permute.xlu0 0
        %522 = vperm.xlu0 %521, %v508
        %v523 = vpop.permute.xlu0 %522
        %v525 = vmul.f32 %v477, %v511
        %v526 = vmul.f32 %v478, %v515
        %v527 = vmul.f32 %v479, %v519
        %v528 = vmul.f32 %v480, %v523
        %v529 = vsel %vm485, %v477, %v525
        %v530 = vsel %vm486, %v478, %v526
        %v531 = vsel %vm487, %v479, %v527
        %v532 = vsel %vm488, %v480, %v528
        %533 = vst.msk [vmem:[%s283] sm:$0xff] %vm332, %v529
        %534 = vst.msk [vmem:[%s283 + $0x8] sm:$0xff] %vm332, %v530
        %535 = vst.msk [vmem:[%s283 + $0x10] sm:$0xff] %vm332, %v531
        %536 = vst.msk [vmem:[%s283 + $0x18] sm:$0xff] %vm332, %v532
        %s537 = sand.u32 %s150, 1
        %s538 = sand.u32 %s150, 1
        %s539 = smul.addr %s538, 32
        %s540 = scalar_lea.vmem [#allocation3], %s539
        // Predicated region
        $region79: #{tpu_custom_call.1} parent=73 // pred_check
          %p541 = pneg %p160
        $region80: #{tpu_custom_call.1} parent=73 // pred_check_branch
          %543 = sbr.rel (%p541) target = $region82
        $region81: #{tpu_custom_call.1} parent=73 // pred_region
          %s544 = smul.addr %s20, 8
          %s545 = sadd.s32 %s21, %s544
          %s546 = smul.addr %s545, 8
          %s547 = scalar_lea.vmem %s5, %s546
          // Predicated region
          $region83: #{tpu_custom_call.1} parent=81 // pred_check
            _
          $region84: #{tpu_custom_call.1} parent=81 // pred_check_branch
            %549 = sbr.rel (0) target = $region86
          $region85: #{tpu_custom_call.1} parent=81 // pred_region
            // Predicated region
            $region87: #{tpu_custom_call.1} parent=85 // pred_check
              _
            $region88: #{tpu_custom_call.1} parent=85 // pred_check_branch
              %551 = sbr.rel (0) target = $region90
            $region89: #{tpu_custom_call.1} parent=85 // pred_region
              // Predicated region
              $region102: #{tpu_custom_call.1} parent=89 // pred_check
                _
              $region103: #{tpu_custom_call.1} parent=89 // pred_check_branch
                %573 = sbr.rel (0) target = $region105
              $region104: #{tpu_custom_call.1} parent=89 // pred_region
                loop: start=0, step=1, limit=1
                $region106: #{tpu_custom_call.1} parent=104 // loop_pre_header
                  _
                $region107: #{tpu_custom_call.1} parent=104 // loop_header
                  %s575 = sphi 0, %s579
                  %p576 = scmp.ge.s32.totalorder %s575, 1
                  %s580 = sphi %s540, %s540
                  %s581 = sphi %s547, %s547
                $region108: #{tpu_custom_call.1} parent=104 // loop_header_branch
                  %578 = sbr.rel (%p576) target = $region112
                $region109: #{tpu_custom_call.1} parent=104 // loop_body
                  %v582 = vld [vmem:[%s580] sm:$0xff]
                  %583 = vst [vmem:[%s581] sm:$0xff] %v582
                  %v584 = vld [vmem:[%s580 + $0x8] sm:$0xff]
                  %585 = vst [vmem:[%s581 + $0x10] sm:$0xff] %v584
                  %v586 = vld [vmem:[%s580 + $0x10] sm:$0xff]
                  %587 = vst [vmem:[%s581 + $0x20] sm:$0xff] %v586
                  %v588 = vld [vmem:[%s580 + $0x18] sm:$0xff]
                  %589 = vst [vmem:[%s581 + $0x30] sm:$0xff] %v588
                $region110: #{tpu_custom_call.1} parent=104 // loop_footer
                  %s579 = sadd.s32 1, %s575
                $region111: #{tpu_custom_call.1} parent=104 // loop_footer_branch
                  %574 = sbr.rel target = $region107
                $region112: #{tpu_custom_call.1} parent=104 // loop_exit
                  _
              $region105: #{tpu_custom_call.1} parent=89 // pred_fallthru
                _
              // Predicated region
              $region113: #{tpu_custom_call.1} parent=89 // pred_check
                _
              $region114: #{tpu_custom_call.1} parent=89 // pred_check_branch
                %591 = sbr.rel target = $region116
              $region115: #{tpu_custom_call.1} parent=89 // pred_region
                _
              $region116: #{tpu_custom_call.1} parent=89 // pred_fallthru
                _
            $region90: #{tpu_custom_call.1} parent=85 // pred_fallthru
              _
            // Predicated region
            $region91: #{tpu_custom_call.1} parent=85 // pred_check
              _
            $region92: #{tpu_custom_call.1} parent=85 // pred_check_branch
              %553 = sbr.rel target = $region94
            $region93: #{tpu_custom_call.1} parent=85 // pred_region
              %s555 = ssub.s32 256, 1
              loop: start=0, step=1, limit=1
              $region95: #{tpu_custom_call.1} parent=93 // loop_pre_header
                _
              $region96: #{tpu_custom_call.1} parent=93 // loop_header
                %s557 = sphi 0, %s561
                %p558 = scmp.ge.s32.totalorder %s557, 1
                %s562 = sphi %s540, %s540
                %s563 = sphi %s547, %s547
              $region97: #{tpu_custom_call.1} parent=93 // loop_header_branch
                %560 = sbr.rel (%p558) target = $region101
              $region98: #{tpu_custom_call.1} parent=93 // loop_body
                %v564 = vld [vmem:[%s562] sm:%s555]
                %565 = vst [vmem:[%s563] sm:%s555] %v564
                %v566 = vld [vmem:[%s562 + $0x8] sm:%s555]
                %567 = vst [vmem:[%s563 + $0x10] sm:%s555] %v566
                %v568 = vld [vmem:[%s562 + $0x10] sm:%s555]
                %569 = vst [vmem:[%s563 + $0x20] sm:%s555] %v568
                %v570 = vld [vmem:[%s562 + $0x18] sm:%s555]
                %571 = vst [vmem:[%s563 + $0x30] sm:%s555] %v570
              $region99: #{tpu_custom_call.1} parent=93 // loop_footer
                %s561 = sadd.s32 1, %s557
              $region100: #{tpu_custom_call.1} parent=93 // loop_footer_branch
                %556 = sbr.rel target = $region96
              $region101: #{tpu_custom_call.1} parent=93 // loop_exit
                _
            $region94: #{tpu_custom_call.1} parent=85 // pred_fallthru
              _
          $region86: #{tpu_custom_call.1} parent=81 // pred_fallthru
            _
          %592 = vnop
        $region82: #{tpu_custom_call.1} parent=73 // pred_fallthru
          _
      $region74: #{tpu_custom_call.1} parent=5 // pred_fallthru
        _
      %p593 = scmp.le.s32.totalorder 2, %s11
      // Predicated region
      $region117: #{tpu_custom_call.1} parent=5 // pred_check
        %p594 = pneg %p593
      $region118: #{tpu_custom_call.1} parent=5 // pred_check_branch
        %596 = sbr.rel (%p594) target = $region120
      $region119: #{tpu_custom_call.1} parent=5 // pred_region
        %s597 = ssub.s32 %s11, 2
        // Predicated region
        $region121: #{tpu_custom_call.1} parent=119 // pred_check
          %p598 = pneg %p166
        $region122: #{tpu_custom_call.1} parent=119 // pred_check_branch
          %600 = sbr.rel (%p598) target = $region124
        $region123: #{tpu_custom_call.1} parent=119 // pred_region
          %s601 = sand.u32 %s151, 1
          %s602 = sand.u32 %s151, 1
          %s603 = smul.addr %s602, 32
          %s604 = scalar_lea.vmem [#allocation3], %s603
        $region124: #{tpu_custom_call.1} parent=119 // pred_fallthru
          _
      $region120: #{tpu_custom_call.1} parent=5 // pred_fallthru
        _
    $region6: #{tpu_custom_call.1} parent=1 // loop_footer
      %s15 = sadd.s32 1, %s11
    $region7: #{tpu_custom_call.1} parent=1 // loop_footer_branch
      %10 = sbr.rel target = $region3
    $region8: #{tpu_custom_call.1} parent=1 // loop_exit
      _

</llo_original>
